<compile_context>
chip_gen: v7x
topology: tpu7x:2x2x1
jax: 0.10.0
libtpu: 0.0.40
codegen_flags: <defaults>
</compile_context>

<pallas_src>
import functools

import jax
import jax.numpy as jnp
from jax.experimental import pallas as pl
from jax.experimental.pallas import tpu as pltpu

# SELU constants (match torch.nn.SELU defaults)
_SELU_ALPHA = 1.6732632423543772
_SELU_SCALE = 1.0507009873554805

_LANE = 128          # lane width (last dim)
_SUBLANE_BF16 = 16   # bf16 sublane pack (batch-tile granularity)


def _round_up(x, m):
    return ((x + m - 1) // m) * m


def _selu_f32(x):
    return _SELU_SCALE * jnp.where(x > 0, x, _SELU_ALPHA * (jnp.exp(x) - 1.0))


def _sigmoid_f32(x):
    # 0.5*(tanh(0.5x)+1) == sigmoid(x); tanh runs on the EUP, no VALU divide.
    return 0.5 * (jnp.tanh(0.5 * x) + 1.0)


def mlp_g_kernel(x_ref,
                 w1_ref, b1_ref,
                 w2_ref, b2_ref,
                 w3_ref, b3_ref,
                 w4_ref, b4_ref,
                 w5_ref, b5_ref,
                 o_ref):
    """Fused MLP generator forward on one (TB, TN) output tile.

    x:        (TB, noise_dim)     f32 (cast to bf16 in-kernel)
    w1:       (noise_dim, hid_pad) bf16
    w2..w4:   (hid_pad, hid_pad)  bf16   (resident across the grid)
    w5 tile:  (hid_pad, TN)       bf16   (N-tiled)
    b_i:      (1, hid_pad|TN)     f32
    o tile:   (TB, TN)            f32 or bf16
    """
    cdt = w1_ref.dtype  # bf16 compute dtype for MXU inputs

    h = x_ref[...].astype(cdt)
    h = jnp.dot(h, w1_ref[...], preferred_element_type=jnp.float32) + b1_ref[...]
    h = _selu_f32(h).astype(cdt)

    h = jnp.dot(h, w2_ref[...], preferred_element_type=jnp.float32) + b2_ref[...]
    h = _selu_f32(h).astype(cdt)

    h = jnp.dot(h, w3_ref[...], preferred_element_type=jnp.float32) + b3_ref[...]
    h = _selu_f32(h).astype(cdt)

    h = jnp.dot(h, w4_ref[...], preferred_element_type=jnp.float32) + b4_ref[...]
    h = _selu_f32(h).astype(cdt)

    h = jnp.dot(h, w5_ref[...], preferred_element_type=jnp.float32) + b5_ref[...]
    o_ref[...] = _sigmoid_f32(h).astype(o_ref.dtype)


def init_mlp_g_params(key, input_size, noise_dim, num_chan, hid_dim,
                      dtype=jnp.float32):
    """Deterministic parameter init (same shapes as the torch module).

    Each torch Linear(in, out) has weight (out, in) and bias (out,); we store
    the weight transposed as (in, out) so the kernel does x @ W.
    """
    out_dim = num_chan * input_size * input_size
    dims = [(noise_dim, hid_dim),
            (hid_dim, hid_dim),
            (hid_dim, hid_dim),
            (hid_dim, hid_dim),
            (hid_dim, out_dim)]
    params = []
    for (d_in, d_out) in dims:
        key, kw, kb = jax.random.split(key, 3)
        bound = 1.0 / jnp.sqrt(jnp.asarray(d_in, dtype))
        w = jax.random.uniform(kw, (d_in, d_out), dtype, -bound, bound)
        b = jax.random.uniform(kb, (1, d_out), dtype, -bound, bound)
        params.append((w, b))
    return params


def _pad_params(params, noise_dim, hid_pad, out_pad, compute_dtype):
    """Zero-pad feature dims; weights -> bf16, biases -> f32.

    The noise (K of layer 1) dim is NOT padded; hidden dims pad to 128 lanes;
    the final output dim pads to a multiple of the N tile.  Zero-padded
    rows/cols contribute nothing, so results are exact after slicing.
    """
    dims_in = [noise_dim, hid_pad, hid_pad, hid_pad, hid_pad]
    dims_out = [hid_pad, hid_pad, hid_pad, hid_pad, out_pad]
    padded = []
    for (w, b), d_in, d_out in zip(params, dims_in, dims_out):
        w_p = jnp.zeros((d_in, d_out), compute_dtype)
        w_p = w_p.at[:w.shape[0], :w.shape[1]].set(w.astype(compute_dtype))
        b_p = jnp.zeros((1, d_out), jnp.float32)
        b_p = b_p.at[:, :b.shape[1]].set(b.astype(jnp.float32))
        padded.append((w_p, b_p))
    return padded


def _vmem_capacity_bytes():
    """Physical VMEM of the current generation; conservative fallback (v7x)."""
    try:
        return int(pltpu.get_tpu_info().vmem_capacity_bytes)
    except Exception:
        return 64 << 20


def _choose_tiles(B, out_dim, hid_pad, noise_dim, vmem_cap):
    """Pick (TB, TN) so the pipelined working set fits comfortably in VMEM."""
    tn = min(_round_up(out_dim, _LANE), 2048)
    out_pad = _round_up(out_dim, tn)
    nn = out_pad // tn

    budget = int(0.5 * vmem_cap)  # headroom for compiler scratch / spills

    def tile_bytes(tb):
        out_io = 2 * tb * tn * 4                     # double-buffered output tile
        epilogue = 2 * tb * tn * 4                   # f32 matmul result + sigmoid temp
        x_io = 2 * tb * max(noise_dim, _LANE) * 4    # input tile (lane-padded layout)
        w5_io = 2 * (hid_pad * tn * 2 + 8 * tn * 4)  # N-tiled last layer (2 bufs)
        resident = 2 * ((noise_dim * hid_pad + 3 * hid_pad * hid_pad) * 2
                        + 4 * 8 * hid_pad * 4)       # w1..w4 / b1..b4 (2 bufs each)
        hidden = 4 * tb * hid_pad * 4                # in-flight f32 hidden activations
        return out_io + epilogue + x_io + w5_io + resident + hidden

    tb = min(1024, _round_up(B, _SUBLANE_BF16))
    while tb > _SUBLANE_BF16 and tile_bytes(tb) > budget:
        tb -= _SUBLANE_BF16

    b_pad = _round_up(B, tb)
    nb = b_pad // tb
    # Megacore: prefer >=2 grid steps (v7x has 2 TensorCores) when B allows.
    if nn == 1 and nb == 1 and B >= 2 * _SUBLANE_BF16:
        tb = _round_up(-(-B // 2), _SUBLANE_BF16)
        b_pad = _round_up(B, tb)
        nb = b_pad // tb

    return tb, tn, b_pad, out_pad, nb, nn, tile_bytes(tb)


@functools.partial(jax.jit, static_argnames=("input_size", "num_chan", "out_dtype"))
def mlp_g_forward(inputs, params, *, input_size, num_chan,
                  out_dtype=jnp.float32):
    """Equivalent of MLP_G.forward.

    inputs: (B, noise_dim) or (B, noise_dim, 1, 1)  (torch view semantics)
    returns: (B, num_chan, input_size, input_size)  in `out_dtype`
             (f32 default matches torch; bf16 is an opt-in to halve HBM writes)
    """
    B = inputs.shape[0]
    noise_dim = inputs.shape[1]
    x = inputs.reshape(B, noise_dim).astype(jnp.float32)

    out_dim = num_chan * input_size * input_size
    hid_dim = params[0][0].shape[1]
    compute_dtype = jnp.bfloat16

    hid_pad = _round_up(hid_dim, _LANE)
    vmem_cap = _vmem_capacity_bytes()
    tb, tn, b_pad, out_pad, nb, nn, est_bytes = _choose_tiles(
        B, out_dim, hid_pad, noise_dim, vmem_cap)

    # Pad the batch rows only; the noise feature dim streams un-padded.
    x_p = x if b_pad == B else jnp.pad(x, ((0, b_pad - B), (0, 0)))

    padded = _pad_params(params, noise_dim, hid_pad, out_pad, compute_dtype)
    flat_params = [t for wb in padded for t in wb]  # w1,b1,...,w5,b5

    # Grid: (N-tiles, batch-tiles).  N outer -> each w5/b5 tile is DMA'd once;
    # x (tiny) re-streams per step; w1..w4/b1..b4 are resident (constant maps).
    grid = (nn, nb)

    x_spec = pl.BlockSpec((tb, noise_dim), lambda j, i: (i, 0))
    out_spec = pl.BlockSpec((tb, tn), lambda j, i: (i, j))
    param_specs = []
    for layer, (w, b) in enumerate(padded):
        if layer < 4:   # resident across the whole grid
            param_specs.append(pl.BlockSpec(w.shape, lambda j, i: (0, 0)))
            param_specs.append(pl.BlockSpec(b.shape, lambda j, i: (0, 0)))
        else:           # final layer: tiled along output columns
            param_specs.append(pl.BlockSpec((hid_pad, tn), lambda j, i: (0, j)))
            param_specs.append(pl.BlockSpec((1, tn), lambda j, i: (0, j)))

    # Generation-aware VMEM limit (~78% of physical: ~100 MiB on v5e/v6e,
    # ~48 MiB on v7x), never below the 16 MiB floor.
    vmem_limit = int(1.25 * est_bytes) + (8 << 20)
    vmem_limit = max(16 << 20, min(vmem_limit, int(0.78 * vmem_cap)))

    out_flat = pl.pallas_call(
        mlp_g_kernel,
        out_shape=jax.ShapeDtypeStruct((b_pad, out_pad), out_dtype),
        grid=grid,
        in_specs=[x_spec] + param_specs,
        out_specs=out_spec,
        compiler_params=pltpu.CompilerParams(
            dimension_semantics=("parallel", "parallel"),
            vmem_limit_bytes=vmem_limit,
        ),
    )(x_p, *flat_params)

    out = out_flat[:B, :out_dim]
    return out.reshape(B, num_chan, input_size, input_size)


def mlp_g_reference_f32(inputs, params, *, input_size, num_chan):
    """Pure-JAX f32 reference (torch semantics) for a loose semantic check."""
    B = inputs.shape[0]
    h = inputs.reshape(B, inputs.shape[1]).astype(jnp.float32)
    for i, (w, b) in enumerate(params):
        h = h @ w + b
        if i < len(params) - 1:
            h = _SELU_SCALE * jnp.where(h > 0, h, _SELU_ALPHA * (jnp.exp(h) - 1.0))
        else:
            h = jax.nn.sigmoid(h)
    return h.reshape(B, num_chan, input_size, input_size)


def mlp_g_reference_matched(inputs, params, *, input_size, num_chan):
    """Pure-JAX reference matching the kernel's precision pipeline
    (bf16 matmul inputs, f32 accumulation, f32 elementwise, tanh-sigmoid)."""
    B = inputs.shape[0]
    h = inputs.reshape(B, inputs.shape[1]).astype(jnp.float32).astype(jnp.bfloat16)
    for i, (w, b) in enumerate(params):
        h = jnp.dot(h, w.astype(jnp.bfloat16),
                    preferred_element_type=jnp.float32) + b.astype(jnp.float32)
        if i < len(params) - 1:
            h = _selu_f32(h).astype(jnp.bfloat16)
        else:
            h = _sigmoid_f32(h)
    return h.reshape(B, num_chan, input_size, input_size)


if __name__ == "__main__":
    # Small shapes consistent with the module's constructor.
    input_size = 8     # spatial H = W
    noise_dim = 16
    num_chan = 2
    hid_dim = 32

    key = jax.random.PRNGKey(0)
    key_p, key_x1, key_x2 = jax.random.split(key, 3)

    params = init_mlp_g_params(key_p, input_size, noise_dim, num_chan, hid_dim)

    # Case 1: tiny batch (B=4), GAN-style noise in NCHW form (B, noise_dim, 1, 1).
    batch = 4
    noise = jax.random.normal(key_x1, (batch, noise_dim, 1, 1), dtype=jnp.float32)

    out = mlp_g_forward(noise, params, input_size=input_size, num_chan=num_chan)
    out = jax.block_until_ready(out)

    ref_matched = mlp_g_reference_matched(noise, params,
                                          input_size=input_size, num_chan=num_chan)
    ref_f32 = mlp_g_reference_f32(noise, params,
                                  input_size=input_size, num_chan=num_chan)

    assert out.shape == (batch, num_chan, input_size, input_size), out.shape
    # Tight check vs a precision-matched reference (same bf16/f32 pipeline).
    assert jnp.allclose(out, ref_matched, atol=2e-3, rtol=2e-3), \
        "mismatch vs precision-matched reference (B=4)"
    # Loose check vs the pure-f32 torch-semantics reference (bf16 matmul error).
    assert jnp.allclose(out, ref_f32, atol=5e-2, rtol=5e-2), \
        "mismatch vs f32 reference (B=4)"

    # Case 2: batch that exercises row padding and a 2-step batch grid
    # (megacore path on v7x) with flat (B, noise_dim) input.
    batch2 = 40
    noise2 = jax.random.normal(key_x2, (batch2, noise_dim), dtype=jnp.float32)

    out2 = mlp_g_forward(noise2, params, input_size=input_size, num_chan=num_chan)
    out2 = jax.block_until_ready(out2)

    ref2_matched = mlp_g_reference_matched(noise2, params,
                                           input_size=input_size, num_chan=num_chan)
    ref2_f32 = mlp_g_reference_f32(noise2, params,
                                   input_size=input_size, num_chan=num_chan)

    assert out2.shape == (batch2, num_chan, input_size, input_size), out2.shape
    assert jnp.allclose(out2, ref2_matched, atol=2e-3, rtol=2e-3), \
        "mismatch vs precision-matched reference (B=40)"
    assert jnp.allclose(out2, ref2_f32, atol=5e-2, rtol=5e-2), \
        "mismatch vs f32 reference (B=40)"

    print("KERNEL_OK")
</pallas_src>

<mosaic_0001>
module attributes {stable_mosaic.version = 11 : i64} {
  func.func @mlp_g_kernel(%arg0: i32, %arg1: i32, %arg2: memref<16x16xf32, #tpu.memory_space<vmem>>, %arg3: memref<16x128xbf16, #tpu.memory_space<vmem>>, %arg4: memref<1x128xf32, #tpu.memory_space<vmem>>, %arg5: memref<128x128xbf16, #tpu.memory_space<vmem>>, %arg6: memref<1x128xf32, #tpu.memory_space<vmem>>, %arg7: memref<128x128xbf16, #tpu.memory_space<vmem>>, %arg8: memref<1x128xf32, #tpu.memory_space<vmem>>, %arg9: memref<128x128xbf16, #tpu.memory_space<vmem>>, %arg10: memref<1x128xf32, #tpu.memory_space<vmem>>, %arg11: memref<128x128xbf16, #tpu.memory_space<vmem>>, %arg12: memref<1x128xf32, #tpu.memory_space<vmem>>, %arg13: memref<16x128xf32, #tpu.memory_space<vmem>>) attributes {dimension_semantics = [#tpu.dimension_semantics<parallel>, #tpu.dimension_semantics<parallel>], iteration_bounds = array<i64: 1, 1>, scalar_prefetch = 0 : i64, scratch_operands = 0 : i64, tpu.core_type = #tpu.core_type<tc>, window_params = [{transform_indices = @transform_0, window_bounds = array<i64: 16, 16>}, {pipeline_mode = #tpu.pipeline_mode<synchronous>, transform_indices = @transform_1, window_bounds = array<i64: 16, 128>}, {pipeline_mode = #tpu.pipeline_mode<synchronous>, transform_indices = @transform_2, window_bounds = array<i64: 1, 128>}, {pipeline_mode = #tpu.pipeline_mode<synchronous>, transform_indices = @transform_3, window_bounds = array<i64: 128, 128>}, {pipeline_mode = #tpu.pipeline_mode<synchronous>, transform_indices = @transform_4, window_bounds = array<i64: 1, 128>}, {pipeline_mode = #tpu.pipeline_mode<synchronous>, transform_indices = @transform_5, window_bounds = array<i64: 128, 128>}, {pipeline_mode = #tpu.pipeline_mode<synchronous>, transform_indices = @transform_6, window_bounds = array<i64: 1, 128>}, {pipeline_mode = #tpu.pipeline_mode<synchronous>, transform_indices = @transform_7, window_bounds = array<i64: 128, 128>}, {pipeline_mode = #tpu.pipeline_mode<synchronous>, transform_indices = @transform_8, window_bounds = array<i64: 1, 128>}, {transform_indices = @transform_9, window_bounds = array<i64: 128, 128>}, {transform_indices = @transform_10, window_bounds = array<i64: 1, 128>}, {transform_indices = @transform_11, window_bounds = array<i64: 16, 128>}]} {
    %c0 = arith.constant 0 : index
    %c0_0 = arith.constant 0 : index
    %0 = vector.load %arg2[%c0, %c0_0] : memref<16x16xf32, #tpu.memory_space<vmem>>, vector<16x16xf32>
    %1 = arith.truncf %0 : vector<16x16xf32> to vector<16x16xbf16>
    %c0_1 = arith.constant 0 : index
    %c0_2 = arith.constant 0 : index
    %2 = vector.load %arg3[%c0_1, %c0_2] : memref<16x128xbf16, #tpu.memory_space<vmem>>, vector<16x128xbf16>
    %cst = arith.constant dense<0.000000e+00> : vector<16x128xf32>
    %3 = tpu.matmul %1, %2, %cst {dimension_numbers = #tpu.dot_dimension_numbers<[1], [0], [0], [1], [0, 0, 1, 1], [], []>} : vector<16x16xbf16>, vector<16x128xbf16>, vector<16x128xf32> -> vector<16x128xf32>
    %c0_3 = arith.constant 0 : index
    %c0_4 = arith.constant 0 : index
    %4 = vector.load %arg4[%c0_3, %c0_4] : memref<1x128xf32, #tpu.memory_space<vmem>>, vector<1x128xf32>
    %5 = vector.broadcast %4 : vector<1x128xf32> to vector<16x128xf32>
    %6 = arith.addf %3, %5 : vector<16x128xf32>
    %cst_5 = arith.constant 0.000000e+00 : f32
    %7 = vector.broadcast %cst_5 : f32 to vector<16x128xf32>
    %8 = arith.cmpf ogt, %6, %7 : vector<16x128xf32>
    %9 = math.exp %6 : vector<16x128xf32>
    %cst_6 = arith.constant 1.000000e+00 : f32
    %10 = vector.broadcast %cst_6 : f32 to vector<16x128xf32>
    %11 = arith.subf %9, %10 : vector<16x128xf32>
    %cst_7 = arith.constant 1.67326319 : f32
    %12 = vector.broadcast %cst_7 : f32 to vector<16x128xf32>
    %13 = arith.mulf %12, %11 : vector<16x128xf32>
    %14 = arith.select %8, %6, %13 : vector<16x128xi1>, vector<16x128xf32>
    %cst_8 = arith.constant 1.05070102 : f32
    %15 = vector.broadcast %cst_8 : f32 to vector<16x128xf32>
    %16 = arith.mulf %15, %14 : vector<16x128xf32>
    %17 = arith.truncf %16 : vector<16x128xf32> to vector<16x128xbf16>
    %c0_9 = arith.constant 0 : index
    %c0_10 = arith.constant 0 : index
    %18 = vector.load %arg5[%c0_9, %c0_10] : memref<128x128xbf16, #tpu.memory_space<vmem>>, vector<128x128xbf16>
    %cst_11 = arith.constant dense<0.000000e+00> : vector<16x128xf32>
    %19 = tpu.matmul %17, %18, %cst_11 {dimension_numbers = #tpu.dot_dimension_numbers<[1], [0], [0], [1], [0, 0, 1, 1], [], []>} : vector<16x128xbf16>, vector<128x128xbf16>, vector<16x128xf32> -> vector<16x128xf32>
    %c0_12 = arith.constant 0 : index
    %c0_13 = arith.constant 0 : index
    %20 = vector.load %arg6[%c0_12, %c0_13] : memref<1x128xf32, #tpu.memory_space<vmem>>, vector<1x128xf32>
    %21 = vector.broadcast %20 : vector<1x128xf32> to vector<16x128xf32>
    %22 = arith.addf %19, %21 : vector<16x128xf32>
    %cst_14 = arith.constant 0.000000e+00 : f32
    %23 = vector.broadcast %cst_14 : f32 to vector<16x128xf32>
    %24 = arith.cmpf ogt, %22, %23 : vector<16x128xf32>
    %25 = math.exp %22 : vector<16x128xf32>
    %cst_15 = arith.constant 1.000000e+00 : f32
    %26 = vector.broadcast %cst_15 : f32 to vector<16x128xf32>
    %27 = arith.subf %25, %26 : vector<16x128xf32>
    %cst_16 = arith.constant 1.67326319 : f32
    %28 = vector.broadcast %cst_16 : f32 to vector<16x128xf32>
    %29 = arith.mulf %28, %27 : vector<16x128xf32>
    %30 = arith.select %24, %22, %29 : vector<16x128xi1>, vector<16x128xf32>
    %cst_17 = arith.constant 1.05070102 : f32
    %31 = vector.broadcast %cst_17 : f32 to vector<16x128xf32>
    %32 = arith.mulf %31, %30 : vector<16x128xf32>
    %33 = arith.truncf %32 : vector<16x128xf32> to vector<16x128xbf16>
    %c0_18 = arith.constant 0 : index
    %c0_19 = arith.constant 0 : index
    %34 = vector.load %arg7[%c0_18, %c0_19] : memref<128x128xbf16, #tpu.memory_space<vmem>>, vector<128x128xbf16>
    %cst_20 = arith.constant dense<0.000000e+00> : vector<16x128xf32>
    %35 = tpu.matmul %33, %34, %cst_20 {dimension_numbers = #tpu.dot_dimension_numbers<[1], [0], [0], [1], [0, 0, 1, 1], [], []>} : vector<16x128xbf16>, vector<128x128xbf16>, vector<16x128xf32> -> vector<16x128xf32>
    %c0_21 = arith.constant 0 : index
    %c0_22 = arith.constant 0 : index
    %36 = vector.load %arg8[%c0_21, %c0_22] : memref<1x128xf32, #tpu.memory_space<vmem>>, vector<1x128xf32>
    %37 = vector.broadcast %36 : vector<1x128xf32> to vector<16x128xf32>
    %38 = arith.addf %35, %37 : vector<16x128xf32>
    %cst_23 = arith.constant 0.000000e+00 : f32
    %39 = vector.broadcast %cst_23 : f32 to vector<16x128xf32>
    %40 = arith.cmpf ogt, %38, %39 : vector<16x128xf32>
    %41 = math.exp %38 : vector<16x128xf32>
    %cst_24 = arith.constant 1.000000e+00 : f32
    %42 = vector.broadcast %cst_24 : f32 to vector<16x128xf32>
    %43 = arith.subf %41, %42 : vector<16x128xf32>
    %cst_25 = arith.constant 1.67326319 : f32
    %44 = vector.broadcast %cst_25 : f32 to vector<16x128xf32>
    %45 = arith.mulf %44, %43 : vector<16x128xf32>
    %46 = arith.select %40, %38, %45 : vector<16x128xi1>, vector<16x128xf32>
    %cst_26 = arith.constant 1.05070102 : f32
    %47 = vector.broadcast %cst_26 : f32 to vector<16x128xf32>
    %48 = arith.mulf %47, %46 : vector<16x128xf32>
    %49 = arith.truncf %48 : vector<16x128xf32> to vector<16x128xbf16>
    %c0_27 = arith.constant 0 : index
    %c0_28 = arith.constant 0 : index
    %50 = vector.load %arg9[%c0_27, %c0_28] : memref<128x128xbf16, #tpu.memory_space<vmem>>, vector<128x128xbf16>
    %cst_29 = arith.constant dense<0.000000e+00> : vector<16x128xf32>
    %51 = tpu.matmul %49, %50, %cst_29 {dimension_numbers = #tpu.dot_dimension_numbers<[1], [0], [0], [1], [0, 0, 1, 1], [], []>} : vector<16x128xbf16>, vector<128x128xbf16>, vector<16x128xf32> -> vector<16x128xf32>
    %c0_30 = arith.constant 0 : index
    %c0_31 = arith.constant 0 : index
    %52 = vector.load %arg10[%c0_30, %c0_31] : memref<1x128xf32, #tpu.memory_space<vmem>>, vector<1x128xf32>
    %53 = vector.broadcast %52 : vector<1x128xf32> to vector<16x128xf32>
    %54 = arith.addf %51, %53 : vector<16x128xf32>
    %cst_32 = arith.constant 0.000000e+00 : f32
    %55 = vector.broadcast %cst_32 : f32 to vector<16x128xf32>
    %56 = arith.cmpf ogt, %54, %55 : vector<16x128xf32>
    %57 = math.exp %54 : vector<16x128xf32>
    %cst_33 = arith.constant 1.000000e+00 : f32
    %58 = vector.broadcast %cst_33 : f32 to vector<16x128xf32>
    %59 = arith.subf %57, %58 : vector<16x128xf32>
    %cst_34 = arith.constant 1.67326319 : f32
    %60 = vector.broadcast %cst_34 : f32 to vector<16x128xf32>
    %61 = arith.mulf %60, %59 : vector<16x128xf32>
    %62 = arith.select %56, %54, %61 : vector<16x128xi1>, vector<16x128xf32>
    %cst_35 = arith.constant 1.05070102 : f32
    %63 = vector.broadcast %cst_35 : f32 to vector<16x128xf32>
    %64 = arith.mulf %63, %62 : vector<16x128xf32>
    %65 = arith.truncf %64 : vector<16x128xf32> to vector<16x128xbf16>
    %c0_36 = arith.constant 0 : index
    %c0_37 = arith.constant 0 : index
    %66 = vector.load %arg11[%c0_36, %c0_37] : memref<128x128xbf16, #tpu.memory_space<vmem>>, vector<128x128xbf16>
    %cst_38 = arith.constant dense<0.000000e+00> : vector<16x128xf32>
    %67 = tpu.matmul %65, %66, %cst_38 {dimension_numbers = #tpu.dot_dimension_numbers<[1], [0], [0], [1], [0, 0, 1, 1], [], []>} : vector<16x128xbf16>, vector<128x128xbf16>, vector<16x128xf32> -> vector<16x128xf32>
    %c0_39 = arith.constant 0 : index
    %c0_40 = arith.constant 0 : index
    %68 = vector.load %arg12[%c0_39, %c0_40] : memref<1x128xf32, #tpu.memory_space<vmem>>, vector<1x128xf32>
    %69 = vector.broadcast %68 : vector<1x128xf32> to vector<16x128xf32>
    %70 = arith.addf %67, %69 : vector<16x128xf32>
    %cst_41 = arith.constant 5.000000e-01 : f32
    %71 = vector.broadcast %cst_41 : f32 to vector<16x128xf32>
    %72 = arith.mulf %71, %70 : vector<16x128xf32>
    %73 = math.tanh %72 : vector<16x128xf32>
    %cst_42 = arith.constant 1.000000e+00 : f32
    %74 = vector.broadcast %cst_42 : f32 to vector<16x128xf32>
    %75 = arith.addf %73, %74 : vector<16x128xf32>
    %cst_43 = arith.constant 5.000000e-01 : f32
    %76 = vector.broadcast %cst_43 : f32 to vector<16x128xf32>
    %77 = arith.mulf %76, %75 : vector<16x128xf32>
    %c0_44 = arith.constant 0 : index
    %c0_45 = arith.constant 0 : index
    %78 = vector.load %arg13[%c0_44, %c0_45] : memref<16x128xf32, #tpu.memory_space<vmem>>, vector<16x128xf32>
    tpu.vector_store %arg13[%c0_44, %c0_45], %77 {strides = array<i32>} : memref<16x128xf32, #tpu.memory_space<vmem>>, vector<16x128xf32>,
    return
  }
  func.func @transform_0(%arg0: i32, %arg1: i32) -> (i32, i32) {
    %c0_i32 = arith.constant 0 : i32
    %c0_i32_0 = arith.constant 0 : i32
    return %arg1, %c0_i32 : i32, i32
  }
  func.func @transform_1(%arg0: i32, %arg1: i32) -> (i32, i32) {
    %c0_i32 = arith.constant 0 : i32
    %c0_i32_0 = arith.constant 0 : i32
    %c0_i32_1 = arith.constant 0 : i32
    return %c0_i32, %c0_i32_0 : i32, i32
  }
  func.func @transform_2(%arg0: i32, %arg1: i32) -> (i32, i32) {
    %c0_i32 = arith.constant 0 : i32
    %c0_i32_0 = arith.constant 0 : i32
    %c0_i32_1 = arith.constant 0 : i32
    return %c0_i32, %c0_i32_0 : i32, i32
  }
  func.func @transform_3(%arg0: i32, %arg1: i32) -> (i32, i32) {
    %c0_i32 = arith.constant 0 : i32
    %c0_i32_0 = arith.constant 0 : i32
    %c0_i32_1 = arith.constant 0 : i32
    return %c0_i32, %c0_i32_0 : i32, i32
  }
  func.func @transform_4(%arg0: i32, %arg1: i32) -> (i32, i32) {
    %c0_i32 = arith.constant 0 : i32
    %c0_i32_0 = arith.constant 0 : i32
    %c0_i32_1 = arith.constant 0 : i32
    return %c0_i32, %c0_i32_0 : i32, i32
  }
  func.func @transform_5(%arg0: i32, %arg1: i32) -> (i32, i32) {
    %c0_i32 = arith.constant 0 : i32
    %c0_i32_0 = arith.constant 0 : i32
    %c0_i32_1 = arith.constant 0 : i32
    return %c0_i32, %c0_i32_0 : i32, i32
  }
  func.func @transform_6(%arg0: i32, %arg1: i32) -> (i32, i32) {
    %c0_i32 = arith.constant 0 : i32
    %c0_i32_0 = arith.constant 0 : i32
    %c0_i32_1 = arith.constant 0 : i32
    return %c0_i32, %c0_i32_0 : i32, i32
  }
  func.func @transform_7(%arg0: i32, %arg1: i32) -> (i32, i32) {
    %c0_i32 = arith.constant 0 : i32
    %c0_i32_0 = arith.constant 0 : i32
    %c0_i32_1 = arith.constant 0 : i32
    return %c0_i32, %c0_i32_0 : i32, i32
  }
  func.func @transform_8(%arg0: i32, %arg1: i32) -> (i32, i32) {
    %c0_i32 = arith.constant 0 : i32
    %c0_i32_0 = arith.constant 0 : i32
    %c0_i32_1 = arith.constant 0 : i32
    return %c0_i32, %c0_i32_0 : i32, i32
  }
  func.func @transform_9(%arg0: i32, %arg1: i32) -> (i32, i32) {
    %c0_i32 = arith.constant 0 : i32
    %c0_i32_0 = arith.constant 0 : i32
    return %c0_i32, %arg0 : i32, i32
  }
  func.func @transform_10(%arg0: i32, %arg1: i32) -> (i32, i32) {
    %c0_i32 = arith.constant 0 : i32
    %c0_i32_0 = arith.constant 0 : i32
    return %c0_i32, %arg0 : i32, i32
  }
  func.func @transform_11(%arg0: i32, %arg1: i32) -> (i32, i32) {
    %c0_i32 = arith.constant 0 : i32
    return %arg1, %arg0 : i32, i32
  }
}

</mosaic_0001>

<llo_original>
// kernel: mlp_g_forward.1
$region0: #{mlp_g_forward.1}
  #allocation0 [shape = 'u32[]', space=smem, size = 0x4, offset = 0x4, fixed_abs, tag = 'smem constant byte address 0x4 - core index']
  #allocation1 [shape = 'u32[144,128]{1,0:T(1,128)}', space=vmem, size = 0x12000, scoped, tag = 'internal scratch']
  %s0 = inlined_call_operand.vmem [shape: f32[16,16], index: 0, kind: input, shape index: {}]
  %s1 = inlined_call_operand.vmem [shape: bf16[16,128], index: 1, kind: input, shape index: {}]
  %s2 = inlined_call_operand.vmem [shape: f32[1,128], index: 2, kind: input, shape index: {}]
  %s3 = inlined_call_operand.vmem [shape: bf16[128,128], index: 3, kind: input, shape index: {}]
  %s4 = inlined_call_operand.vmem [shape: f32[1,128], index: 4, kind: input, shape index: {}]
  %s5 = inlined_call_operand.vmem [shape: bf16[128,128], index: 5, kind: input, shape index: {}]
  %s6 = inlined_call_operand.vmem [shape: f32[1,128], index: 6, kind: input, shape index: {}]
  %s7 = inlined_call_operand.vmem [shape: bf16[128,128], index: 7, kind: input, shape index: {}]
  %s8 = inlined_call_operand.vmem [shape: f32[1,128], index: 8, kind: input, shape index: {}]
  %s9 = inlined_call_operand.vmem [shape: bf16[128,128], index: 9, kind: input, shape index: {}]
  %s10 = inlined_call_operand.vmem [shape: f32[1,128], index: 10, kind: input, shape index: {}]
  %s11 = inlined_call_operand.vmem [shape: f32[16,128], index: 11, kind: output, shape index: {}]
  %s12 = sld [smem:[#allocation0]]
  $region54: #{mlp_g_forward.1} parent=0
    _
  %s14 = ssub.s32 1, %s12
  %s15 = scalar_select 0, %s14, %s12
  // Predicated region
  $region2: #{mlp_g_forward.1} parent=0 // pred_check
    _
  $region3: #{mlp_g_forward.1} parent=0 // pred_check_branch
    %17 = sbr.rel (0) target = $region5
  $region4: #{mlp_g_forward.1} parent=0 // pred_region
    _
  $region5: #{mlp_g_forward.1} parent=0 // pred_fallthru
    _
  // Predicated region
  $region6: #{mlp_g_forward.1} parent=0 // pred_check
    _
  $region7: #{mlp_g_forward.1} parent=0 // pred_check_branch
    %19 = sbr.rel (0) target = $region9
  $region8: #{mlp_g_forward.1} parent=0 // pred_region
    _
  $region9: #{mlp_g_forward.1} parent=0 // pred_fallthru
    _
  // Predicated region
  $region10: #{mlp_g_forward.1} parent=0 // pred_check
    _
  $region11: #{mlp_g_forward.1} parent=0 // pred_check_branch
    %21 = sbr.rel (0) target = $region13
  $region12: #{mlp_g_forward.1} parent=0 // pred_region
    _
  $region13: #{mlp_g_forward.1} parent=0 // pred_fallthru
    _
  // Predicated region
  $region14: #{mlp_g_forward.1} parent=0 // pred_check
    _
  $region15: #{mlp_g_forward.1} parent=0 // pred_check_branch
    %23 = sbr.rel (0) target = $region17
  $region16: #{mlp_g_forward.1} parent=0 // pred_region
    _
  $region17: #{mlp_g_forward.1} parent=0 // pred_fallthru
    _
  // Predicated region
  $region18: #{mlp_g_forward.1} parent=0 // pred_check
    _
  $region19: #{mlp_g_forward.1} parent=0 // pred_check_branch
    %25 = sbr.rel (0) target = $region21
  $region20: #{mlp_g_forward.1} parent=0 // pred_region
    _
  $region21: #{mlp_g_forward.1} parent=0 // pred_fallthru
    _
  // Predicated region
  $region22: #{mlp_g_forward.1} parent=0 // pred_check
    _
  $region23: #{mlp_g_forward.1} parent=0 // pred_check_branch
    %27 = sbr.rel (0) target = $region25
  $region24: #{mlp_g_forward.1} parent=0 // pred_region
    _
  $region25: #{mlp_g_forward.1} parent=0 // pred_fallthru
    _
  // Predicated region
  $region26: #{mlp_g_forward.1} parent=0 // pred_check
    _
  $region27: #{mlp_g_forward.1} parent=0 // pred_check_branch
    %29 = sbr.rel (0) target = $region29
  $region28: #{mlp_g_forward.1} parent=0 // pred_region
    _
  $region29: #{mlp_g_forward.1} parent=0 // pred_fallthru
    _
  // Predicated region
  $region30: #{mlp_g_forward.1} parent=0 // pred_check
    _
  $region31: #{mlp_g_forward.1} parent=0 // pred_check_branch
    %31 = sbr.rel (0) target = $region33
  $region32: #{mlp_g_forward.1} parent=0 // pred_region
    _
  $region33: #{mlp_g_forward.1} parent=0 // pred_fallthru
    _
  // Predicated region
  $region34: #{mlp_g_forward.1} parent=0 // pred_check
    _
  $region35: #{mlp_g_forward.1} parent=0 // pred_check_branch
    %33 = sbr.rel (0) target = $region37
  $region36: #{mlp_g_forward.1} parent=0 // pred_region
    _
  $region37: #{mlp_g_forward.1} parent=0 // pred_fallthru
    _
  // Predicated region
  $region38: #{mlp_g_forward.1} parent=0 // pred_check
    _
  $region39: #{mlp_g_forward.1} parent=0 // pred_check_branch
    %35 = sbr.rel (0) target = $region41
  $region40: #{mlp_g_forward.1} parent=0 // pred_region
    _
  $region41: #{mlp_g_forward.1} parent=0 // pred_fallthru
    _
  // Predicated region
  $region42: #{mlp_g_forward.1} parent=0 // pred_check
    _
  $region43: #{mlp_g_forward.1} parent=0 // pred_check_branch
    %37 = sbr.rel (0) target = $region45
  $region44: #{mlp_g_forward.1} parent=0 // pred_region
    _
  $region45: #{mlp_g_forward.1} parent=0 // pred_fallthru
    _
  %v39 = vld [vmem:[%s0] sm:$0xff]
  %v40 = vld [vmem:[%s0 + $0x8] sm:$0xff]
  %v41 = vpack.c.bf16 %v40, %v39
  %v42 = vld [vmem:[%s1] sm:$0xf]
  %v43 = vld [vmem:[%s1 + $0x4] sm:$0xf]
  %v44 = vld [vmem:[%s2] sm:$0x1]
  %v46 = vlaneseq
  %v47 = vshrl.u32 %v46, 7
  %v48 = vsub.s32 0, %v47
  %v49 = vrot.slane %v44, %v48
  %v53 = vunpack.c.l.b16 %v42
  %v54 = vunpack.c.l.b16 %v43
  %v55 = vpack.c.b16 %v54, %v53
  %vm57 = vcmask 130048
  %v59 = vsel %vm57, %v41, 0
  %61 = vmatprep.subr.bf16.mxu0 0
  %62 = vmatpush1.bf16.msra.mxu0 %v55
  %63 = vmatprep.subr.bf16.mxu0 0
  %64 = vmatpush1.bf16.msra.mxu0 0
  %65 = vmatprep.subr.bf16.mxu0 0
  %66 = vmatpush1.bf16.msra.mxu0 0
  %67 = vmatprep.subr.bf16.mxu0 0
  %68 = vmatpush1.bf16.msra.mxu0 0
  %69 = vmatprep.subr.bf16.mxu0 0
  %70 = vmatpush1.bf16.msra.mxu0 0
  %71 = vmatprep.subr.bf16.mxu0 0
  %72 = vmatpush1.bf16.msra.mxu0 0
  %73 = vmatprep.subr.bf16.mxu0 0
  %74 = vmatpush1.bf16.msra.mxu0 0
  %75 = vmatprep.subr.bf16.mxu0 0
  %76 = vmatpush1.bf16.msra.mxu0 0
  %77 = vmatprep.subr.bf16.mxu0 0
  %78 = vmatpush1.bf16.msra.mxu0 0
  %79 = vmatprep.subr.bf16.mxu0 0
  %80 = vmatpush1.bf16.msra.mxu0 0
  %81 = vmatprep.subr.bf16.mxu0 0
  %82 = vmatpush1.bf16.msra.mxu0 0
  %83 = vmatprep.subr.bf16.mxu0 0
  %84 = vmatpush1.bf16.msra.mxu0 0
  %85 = vmatprep.subr.bf16.mxu0 0
  %86 = vmatpush1.bf16.msra.mxu0 0
  %87 = vmatprep.subr.bf16.mxu0 0
  %88 = vmatpush1.bf16.msra.mxu0 0
  %89 = vmatprep.subr.bf16.mxu0 0
  %90 = vmatpush1.bf16.msra.mxu0 0
  %91 = vmatprep.subr.bf16.mxu0 0
  %92 = vmatpush1.bf16.msra.mxu0 0
  %93 = vmatprep.mubr.bf16.mxu0 0
  %94 = vmatmul.mubr.bf16.gmra.mrb[0].mxu0 %v59
  %v95 = vpop.f32.mrb[0].mxu0
  %v96 = vadd.f32 %v49, %v95
  %v97 = vpop.f32.mrb[0].mxu0
  %v98 = vpop.f32.mrb[0].mxu0
  %v99 = vadd.f32 %v49, %v98
  %v100 = vpop.f32.mrb[0].mxu0
  %101 = vdwg.mxu0
  %vm102 = vcmp.gt.f32.partialorder %v96, 0.0
  %vm103 = vcmp.gt.f32.partialorder %v99, 0.0
  %v104 = vmul.f32 %v96, 1.442695
  %v105 = vpow.pop %v104
  %v106 = vmul.f32 %v99, 1.442695
  %v107 = vpow.pop %v106
  %v108 = vsub.f32 %v105, 1.0
  %v109 = vsub.f32 %v107, 1.0
  %v110 = vmul.f32 %v108, 1.6732632
  %v111 = vmul.f32 %v109, 1.6732632
  %v112 = vsel %vm102, %v96, %v110
  %v113 = vsel %vm103, %v99, %v111
  %v114 = vmul.f32 %v112, 1.050701
  %v115 = vmul.f32 %v113, 1.050701
  %v116 = vpack.c.bf16 %v115, %v114
  %v117 = vld [vmem:[%s3] sm:$0xf]
  %v118 = vld [vmem:[%s3 + $0x4] sm:$0xf]
  %v119 = vld [vmem:[%s3 + $0x8] sm:$0xf]
  %v120 = vld [vmem:[%s3 + $0xc] sm:$0xf]
  %v121 = vld [vmem:[%s3 + $0x10] sm:$0xf]
  %v122 = vld [vmem:[%s3 + $0x14] sm:$0xf]
  %v123 = vld [vmem:[%s3 + $0x18] sm:$0xf]
  %v124 = vld [vmem:[%s3 + $0x1c] sm:$0xf]
  %v125 = vld [vmem:[%s3 + $0x20] sm:$0xf]
  %v126 = vld [vmem:[%s3 + $0x24] sm:$0xf]
  %v127 = vld [vmem:[%s3 + $0x28] sm:$0xf]
  %v128 = vld [vmem:[%s3 + $0x2c] sm:$0xf]
  %v129 = vld [vmem:[%s3 + $0x30] sm:$0xf]
  %v130 = vld [vmem:[%s3 + $0x34] sm:$0xf]
  %v131 = vld [vmem:[%s3 + $0x38] sm:$0xf]
  %v132 = vld [vmem:[%s3 + $0x3c] sm:$0xf]
  %v133 = vld [vmem:[%s4] sm:$0x1]
  %v135 = vlaneseq
  %v136 = vshrl.u32 %v135, 7
  %v137 = vsub.s32 0, %v136
  %v138 = vrot.slane %v133, %v137
  %v156 = vunpack.c.l.b16 %v117
  %v157 = vunpack.c.l.b16 %v118
  %v158 = vunpack.c.l.b16 %v119
  %v159 = vunpack.c.l.b16 %v120
  %v160 = vunpack.c.l.b16 %v121
  %v161 = vunpack.c.l.b16 %v122
  %v162 = vunpack.c.l.b16 %v123
  %v163 = vunpack.c.l.b16 %v124
  %v164 = vunpack.c.l.b16 %v125
  %v165 = vunpack.c.l.b16 %v126
  %v166 = vunpack.c.l.b16 %v127
  %v167 = vunpack.c.l.b16 %v128
  %v168 = vunpack.c.l.b16 %v129
  %v169 = vunpack.c.l.b16 %v130
  %v170 = vunpack.c.l.b16 %v131
  %v171 = vunpack.c.l.b16 %v132
  %v172 = vpack.c.b16 %v157, %v156
  %v173 = vpack.c.b16 %v159, %v158
  %v174 = vpack.c.b16 %v161, %v160
  %v175 = vpack.c.b16 %v163, %v162
  %v176 = vpack.c.b16 %v165, %v164
  %v177 = vpack.c.b16 %v167, %v166
  %v178 = vpack.c.b16 %v169, %v168
  %v179 = vpack.c.b16 %v171, %v170
  %188 = vmatprep.subr.bf16.mxu0 0
  %189 = vmatpush1.bf16.msra.mxu0 %v172
  %190 = vmatprep.subr.bf16.mxu0 0
  %191 = vmatpush1.bf16.msra.mxu0 %v173
  %192 = vmatprep.subr.bf16.mxu0 0
  %193 = vmatpush1.bf16.msra.mxu0 %v174
  %194 = vmatprep.subr.bf16.mxu0 0
  %195 = vmatpush1.bf16.msra.mxu0 %v175
  %196 = vmatprep.subr.bf16.mxu0 0
  %197 = vmatpush1.bf16.msra.mxu0 %v176
  %198 = vmatprep.subr.bf16.mxu0 0
  %199 = vmatpush1.bf16.msra.mxu0 %v177
  %200 = vmatprep.subr.bf16.mxu0 0
  %201 = vmatpush1.bf16.msra.mxu0 %v178
  %202 = vmatprep.subr.bf16.mxu0 0
  %203 = vmatpush1.bf16.msra.mxu0 %v179
  %204 = vmatprep.subr.bf16.mxu0 0
  %205 = vmatpush1.bf16.msra.mxu0 0
  %206 = vmatprep.subr.bf16.mxu0 0
  %207 = vmatpush1.bf16.msra.mxu0 0
  %208 = vmatprep.subr.bf16.mxu0 0
  %209 = vmatpush1.bf16.msra.mxu0 0
  %210 = vmatprep.subr.bf16.mxu0 0
  %211 = vmatpush1.bf16.msra.mxu0 0
  %212 = vmatprep.subr.bf16.mxu0 0
  %213 = vmatpush1.bf16.msra.mxu0 0
  %214 = vmatprep.subr.bf16.mxu0 0
  %215 = vmatpush1.bf16.msra.mxu0 0
  %216 = vmatprep.subr.bf16.mxu0 0
  %217 = vmatpush1.bf16.msra.mxu0 0
  %218 = vmatprep.subr.bf16.mxu0 0
  %219 = vmatpush1.bf16.msra.mxu0 0
  %220 = vmatprep.mubr.bf16.mxu0 0
  %221 = vmatmul.mubr.bf16.gmra.mrb[0].mxu0 %v116
  %v222 = vpop.f32.mrb[0].mxu0
  %v223 = vadd.f32 %v138, %v222
  %v224 = vpop.f32.mrb[0].mxu0
  %v225 = vpop.f32.mrb[0].mxu0
  %v226 = vadd.f32 %v138, %v225
  %v227 = vpop.f32.mrb[0].mxu0
  %228 = vdwg.mxu0
  %vm229 = vcmp.gt.f32.partialorder %v223, 0.0
  %vm230 = vcmp.gt.f32.partialorder %v226, 0.0
  %v231 = vmul.f32 %v223, 1.442695
  %v232 = vpow.pop %v231
  %v233 = vmul.f32 %v226, 1.442695
  %v234 = vpow.pop %v233
  %v235 = vsub.f32 %v232, 1.0
  %v236 = vsub.f32 %v234, 1.0
  %v237 = vmul.f32 %v235, 1.6732632
  %v238 = vmul.f32 %v236, 1.6732632
  %v239 = vsel %vm229, %v223, %v237
  %v240 = vsel %vm230, %v226, %v238
  %v241 = vmul.f32 %v239, 1.050701
  %v242 = vmul.f32 %v240, 1.050701
  %v243 = vpack.c.bf16 %v242, %v241
  %v244 = vld [vmem:[%s5] sm:$0xf]
  %v245 = vld [vmem:[%s5 + $0x4] sm:$0xf]
  %v246 = vld [vmem:[%s5 + $0x8] sm:$0xf]
  %v247 = vld [vmem:[%s5 + $0xc] sm:$0xf]
  %v248 = vld [vmem:[%s5 + $0x10] sm:$0xf]
  %v249 = vld [vmem:[%s5 + $0x14] sm:$0xf]
  %v250 = vld [vmem:[%s5 + $0x18] sm:$0xf]
  %v251 = vld [vmem:[%s5 + $0x1c] sm:$0xf]
  %v252 = vld [vmem:[%s5 + $0x20] sm:$0xf]
  %v253 = vld [vmem:[%s5 + $0x24] sm:$0xf]
  %v254 = vld [vmem:[%s5 + $0x28] sm:$0xf]
  %v255 = vld [vmem:[%s5 + $0x2c] sm:$0xf]
  %v256 = vld [vmem:[%s5 + $0x30] sm:$0xf]
  %v257 = vld [vmem:[%s5 + $0x34] sm:$0xf]
  %v258 = vld [vmem:[%s5 + $0x38] sm:$0xf]
  %v259 = vld [vmem:[%s5 + $0x3c] sm:$0xf]
  %v260 = vld [vmem:[%s6] sm:$0x1]
  %v262 = vlaneseq
  %v263 = vshrl.u32 %v262, 7
  %v264 = vsub.s32 0, %v263
  %v265 = vrot.slane %v260, %v264
  %v283 = vunpack.c.l.b16 %v244
  %v284 = vunpack.c.l.b16 %v245
  %v285 = vunpack.c.l.b16 %v246
  %v286 = vunpack.c.l.b16 %v247
  %v287 = vunpack.c.l.b16 %v248
  %v288 = vunpack.c.l.b16 %v249
  %v289 = vunpack.c.l.b16 %v250
  %v290 = vunpack.c.l.b16 %v251
  %v291 = vunpack.c.l.b16 %v252
  %v292 = vunpack.c.l.b16 %v253
  %v293 = vunpack.c.l.b16 %v254
  %v294 = vunpack.c.l.b16 %v255
  %v295 = vunpack.c.l.b16 %v256
  %v296 = vunpack.c.l.b16 %v257
  %v297 = vunpack.c.l.b16 %v258
  %v298 = vunpack.c.l.b16 %v259
  %v299 = vpack.c.b16 %v284, %v283
  %v300 = vpack.c.b16 %v286, %v285
  %v301 = vpack.c.b16 %v288, %v287
  %v302 = vpack.c.b16 %v290, %v289
  %v303 = vpack.c.b16 %v292, %v291
  %v304 = vpack.c.b16 %v294, %v293
  %v305 = vpack.c.b16 %v296, %v295
  %v306 = vpack.c.b16 %v298, %v297
  %315 = vmatprep.subr.bf16.mxu0 0
  %316 = vmatpush1.bf16.msra.mxu0 %v299
  %317 = vmatprep.subr.bf16.mxu0 0
  %318 = vmatpush1.bf16.msra.mxu0 %v300
  %319 = vmatprep.subr.bf16.mxu0 0
  %320 = vmatpush1.bf16.msra.mxu0 %v301
  %321 = vmatprep.subr.bf16.mxu0 0
  %322 = vmatpush1.bf16.msra.mxu0 %v302
  %323 = vmatprep.subr.bf16.mxu0 0
  %324 = vmatpush1.bf16.msra.mxu0 %v303
  %325 = vmatprep.subr.bf16.mxu0 0
  %326 = vmatpush1.bf16.msra.mxu0 %v304
  %327 = vmatprep.subr.bf16.mxu0 0
  %328 = vmatpush1.bf16.msra.mxu0 %v305
  %329 = vmatprep.subr.bf16.mxu0 0
  %330 = vmatpush1.bf16.msra.mxu0 %v306
  %331 = vmatprep.subr.bf16.mxu0 0
  %332 = vmatpush1.bf16.msra.mxu0 0
  %333 = vmatprep.subr.bf16.mxu0 0
  %334 = vmatpush1.bf16.msra.mxu0 0
  %335 = vmatprep.subr.bf16.mxu0 0
  %336 = vmatpush1.bf16.msra.mxu0 0
  %337 = vmatprep.subr.bf16.mxu0 0
  %338 = vmatpush1.bf16.msra.mxu0 0
  %339 = vmatprep.subr.bf16.mxu0 0
  %340 = vmatpush1.bf16.msra.mxu0 0
  %341 = vmatprep.subr.bf16.mxu0 0
  %342 = vmatpush1.bf16.msra.mxu0 0
  %343 = vmatprep.subr.bf16.mxu0 0
  %344 = vmatpush1.bf16.msra.mxu0 0
  %345 = vmatprep.subr.bf16.mxu0 0
  %346 = vmatpush1.bf16.msra.mxu0 0
  %347 = vmatprep.mubr.bf16.mxu0 0
  %348 = vmatmul.mubr.bf16.gmra.mrb[0].mxu0 %v243
  %v349 = vpop.f32.mrb[0].mxu0
  %v350 = vadd.f32 %v265, %v349
  %v351 = vpop.f32.mrb[0].mxu0
  %v352 = vpop.f32.mrb[0].mxu0
  %v353 = vadd.f32 %v265, %v352
  %v354 = vpop.f32.mrb[0].mxu0
  %355 = vdwg.mxu0
  %vm356 = vcmp.gt.f32.partialorder %v350, 0.0
  %vm357 = vcmp.gt.f32.partialorder %v353, 0.0
  %v358 = vmul.f32 %v350, 1.442695
  %v359 = vpow.pop %v358
  %v360 = vmul.f32 %v353, 1.442695
  %v361 = vpow.pop %v360
  %v362 = vsub.f32 %v359, 1.0
  %v363 = vsub.f32 %v361, 1.0
  %v364 = vmul.f32 %v362, 1.6732632
  %v365 = vmul.f32 %v363, 1.6732632
  %v366 = vsel %vm356, %v350, %v364
  %v367 = vsel %vm357, %v353, %v365
  %v368 = vmul.f32 %v366, 1.050701
  %v369 = vmul.f32 %v367, 1.050701
  %v370 = vpack.c.bf16 %v369, %v368
  %v371 = vld [vmem:[%s7] sm:$0xf]
  %v372 = vld [vmem:[%s7 + $0x4] sm:$0xf]
  %v373 = vld [vmem:[%s7 + $0x8] sm:$0xf]
  %v374 = vld [vmem:[%s7 + $0xc] sm:$0xf]
  %v375 = vld [vmem:[%s7 + $0x10] sm:$0xf]
  %v376 = vld [vmem:[%s7 + $0x14] sm:$0xf]
  %v377 = vld [vmem:[%s7 + $0x18] sm:$0xf]
  %v378 = vld [vmem:[%s7 + $0x1c] sm:$0xf]
  %v379 = vld [vmem:[%s7 + $0x20] sm:$0xf]
  %v380 = vld [vmem:[%s7 + $0x24] sm:$0xf]
  %v381 = vld [vmem:[%s7 + $0x28] sm:$0xf]
  %v382 = vld [vmem:[%s7 + $0x2c] sm:$0xf]
  %v383 = vld [vmem:[%s7 + $0x30] sm:$0xf]
  %v384 = vld [vmem:[%s7 + $0x34] sm:$0xf]
  %v385 = vld [vmem:[%s7 + $0x38] sm:$0xf]
  %v386 = vld [vmem:[%s7 + $0x3c] sm:$0xf]
  %v387 = vld [vmem:[%s8] sm:$0x1]
  %v389 = vlaneseq
  %v390 = vshrl.u32 %v389, 7
  %v391 = vsub.s32 0, %v390
  %v392 = vrot.slane %v387, %v391
  %v410 = vunpack.c.l.b16 %v371
  %v411 = vunpack.c.l.b16 %v372
  %v412 = vunpack.c.l.b16 %v373
  %v413 = vunpack.c.l.b16 %v374
  %v414 = vunpack.c.l.b16 %v375
  %v415 = vunpack.c.l.b16 %v376
  %v416 = vunpack.c.l.b16 %v377
  %v417 = vunpack.c.l.b16 %v378
  %v418 = vunpack.c.l.b16 %v379
  %v419 = vunpack.c.l.b16 %v380
  %v420 = vunpack.c.l.b16 %v381
  %v421 = vunpack.c.l.b16 %v382
  %v422 = vunpack.c.l.b16 %v383
  %v423 = vunpack.c.l.b16 %v384
  %v424 = vunpack.c.l.b16 %v385
  %v425 = vunpack.c.l.b16 %v386
  %v426 = vpack.c.b16 %v411, %v410
  %v427 = vpack.c.b16 %v413, %v412
  %v428 = vpack.c.b16 %v415, %v414
  %v429 = vpack.c.b16 %v417, %v416
  %v430 = vpack.c.b16 %v419, %v418
  %v431 = vpack.c.b16 %v421, %v420
  %v432 = vpack.c.b16 %v423, %v422
  %v433 = vpack.c.b16 %v425, %v424
  %442 = vmatprep.subr.bf16.mxu0 0
  %443 = vmatpush1.bf16.msra.mxu0 %v426
  %444 = vmatprep.subr.bf16.mxu0 0
  %445 = vmatpush1.bf16.msra.mxu0 %v427
  %446 = vmatprep.subr.bf16.mxu0 0
  %447 = vmatpush1.bf16.msra.mxu0 %v428
  %448 = vmatprep.subr.bf16.mxu0 0
  %449 = vmatpush1.bf16.msra.mxu0 %v429
  %450 = vmatprep.subr.bf16.mxu0 0
  %451 = vmatpush1.bf16.msra.mxu0 %v430
  %452 = vmatprep.subr.bf16.mxu0 0
  %453 = vmatpush1.bf16.msra.mxu0 %v431
  %454 = vmatprep.subr.bf16.mxu0 0
  %455 = vmatpush1.bf16.msra.mxu0 %v432
  %456 = vmatprep.subr.bf16.mxu0 0
  %457 = vmatpush1.bf16.msra.mxu0 %v433
  %458 = vmatprep.subr.bf16.mxu0 0
  %459 = vmatpush1.bf16.msra.mxu0 0
  %460 = vmatprep.subr.bf16.mxu0 0
  %461 = vmatpush1.bf16.msra.mxu0 0
  %462 = vmatprep.subr.bf16.mxu0 0
  %463 = vmatpush1.bf16.msra.mxu0 0
  %464 = vmatprep.subr.bf16.mxu0 0
  %465 = vmatpush1.bf16.msra.mxu0 0
  %466 = vmatprep.subr.bf16.mxu0 0
  %467 = vmatpush1.bf16.msra.mxu0 0
  %468 = vmatprep.subr.bf16.mxu0 0
  %469 = vmatpush1.bf16.msra.mxu0 0
  %470 = vmatprep.subr.bf16.mxu0 0
  %471 = vmatpush1.bf16.msra.mxu0 0
  %472 = vmatprep.subr.bf16.mxu0 0
  %473 = vmatpush1.bf16.msra.mxu0 0
  %474 = vmatprep.mubr.bf16.mxu0 0
  %475 = vmatmul.mubr.bf16.gmra.mrb[0].mxu0 %v370
  %v476 = vpop.f32.mrb[0].mxu0
  %v477 = vadd.f32 %v392, %v476
  %v478 = vpop.f32.mrb[0].mxu0
  %v479 = vpop.f32.mrb[0].mxu0
  %v480 = vadd.f32 %v392, %v479
  %v481 = vpop.f32.mrb[0].mxu0
  %482 = vdwg.mxu0
  %vm483 = vcmp.gt.f32.partialorder %v477, 0.0
  %vm484 = vcmp.gt.f32.partialorder %v480, 0.0
  %v485 = vmul.f32 %v477, 1.442695
  %v486 = vpow.pop %v485
  %v487 = vmul.f32 %v480, 1.442695
  %v488 = vpow.pop %v487
  %v489 = vsub.f32 %v486, 1.0
  %v490 = vsub.f32 %v488, 1.0
  %v491 = vmul.f32 %v489, 1.6732632
  %v492 = vmul.f32 %v490, 1.6732632
  %v493 = vsel %vm483, %v477, %v491
  %v494 = vsel %vm484, %v480, %v492
  %v495 = vmul.f32 %v493, 1.050701
  %v496 = vmul.f32 %v494, 1.050701
  %v497 = vpack.c.bf16 %v496, %v495
  %v498 = vld [vmem:[%s9] sm:$0xf]
  %v499 = vld [vmem:[%s9 + $0x4] sm:$0xf]
  %v500 = vld [vmem:[%s9 + $0x8] sm:$0xf]
  %v501 = vld [vmem:[%s9 + $0xc] sm:$0xf]
  %v502 = vld [vmem:[%s9 + $0x10] sm:$0xf]
  %v503 = vld [vmem:[%s9 + $0x14] sm:$0xf]
  %v504 = vld [vmem:[%s9 + $0x18] sm:$0xf]
  %v505 = vld [vmem:[%s9 + $0x1c] sm:$0xf]
  %v506 = vld [vmem:[%s9 + $0x20] sm:$0xf]
  %v507 = vld [vmem:[%s9 + $0x24] sm:$0xf]
  %v508 = vld [vmem:[%s9 + $0x28] sm:$0xf]
  %v509 = vld [vmem:[%s9 + $0x2c] sm:$0xf]
  %v510 = vld [vmem:[%s9 + $0x30] sm:$0xf]
  %v511 = vld [vmem:[%s9 + $0x34] sm:$0xf]
  %v512 = vld [vmem:[%s9 + $0x38] sm:$0xf]
  %v513 = vld [vmem:[%s9 + $0x3c] sm:$0xf]
  %v514 = vld [vmem:[%s10] sm:$0x1]
  %v516 = vlaneseq
  %v517 = vshrl.u32 %v516, 7
  %v518 = vsub.s32 0, %v517
  %v519 = vrot.slane %v514, %v518
  %v537 = vunpack.c.l.b16 %v498
  %v538 = vunpack.c.l.b16 %v499
  %v539 = vunpack.c.l.b16 %v500
  %v540 = vunpack.c.l.b16 %v501
  %v541 = vunpack.c.l.b16 %v502
  %v542 = vunpack.c.l.b16 %v503
  %v543 = vunpack.c.l.b16 %v504
  %v544 = vunpack.c.l.b16 %v505
  %v545 = vunpack.c.l.b16 %v506
  %v546 = vunpack.c.l.b16 %v507
  %v547 = vunpack.c.l.b16 %v508
  %v548 = vunpack.c.l.b16 %v509
  %v549 = vunpack.c.l.b16 %v510
  %v550 = vunpack.c.l.b16 %v511
  %v551 = vunpack.c.l.b16 %v512
  %v552 = vunpack.c.l.b16 %v513
  %v553 = vpack.c.b16 %v538, %v537
  %v554 = vpack.c.b16 %v540, %v539
  %v555 = vpack.c.b16 %v542, %v541
  %v556 = vpack.c.b16 %v544, %v543
  %v557 = vpack.c.b16 %v546, %v545
  %v558 = vpack.c.b16 %v548, %v547
  %v559 = vpack.c.b16 %v550, %v549
  %v560 = vpack.c.b16 %v552, %v551
  %569 = vmatprep.subr.bf16.mxu0 0
  %570 = vmatpush1.bf16.msra.mxu0 %v553
  %571 = vmatprep.subr.bf16.mxu0 0
  %572 = vmatpush1.bf16.msra.mxu0 %v554
  %573 = vmatprep.subr.bf16.mxu0 0
  %574 = vmatpush1.bf16.msra.mxu0 %v555
  %575 = vmatprep.subr.bf16.mxu0 0
  %576 = vmatpush1.bf16.msra.mxu0 %v556
  %577 = vmatprep.subr.bf16.mxu0 0
  %578 = vmatpush1.bf16.msra.mxu0 %v557
  %579 = vmatprep.subr.bf16.mxu0 0
  %580 = vmatpush1.bf16.msra.mxu0 %v558
  %581 = vmatprep.subr.bf16.mxu0 0
  %582 = vmatpush1.bf16.msra.mxu0 %v559
  %583 = vmatprep.subr.bf16.mxu0 0
  %584 = vmatpush1.bf16.msra.mxu0 %v560
  %585 = vmatprep.subr.bf16.mxu0 0
  %586 = vmatpush1.bf16.msra.mxu0 0
  %587 = vmatprep.subr.bf16.mxu0 0
  %588 = vmatpush1.bf16.msra.mxu0 0
  %589 = vmatprep.subr.bf16.mxu0 0
  %590 = vmatpush1.bf16.msra.mxu0 0
  %591 = vmatprep.subr.bf16.mxu0 0
  %592 = vmatpush1.bf16.msra.mxu0 0
  %593 = vmatprep.subr.bf16.mxu0 0
  %594 = vmatpush1.bf16.msra.mxu0 0
  %595 = vmatprep.subr.bf16.mxu0 0
  %596 = vmatpush1.bf16.msra.mxu0 0
  %597 = vmatprep.subr.bf16.mxu0 0
  %598 = vmatpush1.bf16.msra.mxu0 0
  %599 = vmatprep.subr.bf16.mxu0 0
  %600 = vmatpush1.bf16.msra.mxu0 0
  %601 = vmatprep.mubr.bf16.mxu0 0
  %602 = vmatmul.mubr.bf16.gmra.mrb[0].mxu0 %v497
  %v603 = vpop.f32.mrb[0].mxu0
  %v604 = vadd.f32 %v519, %v603
  %v605 = vpop.f32.mrb[0].mxu0
  %v606 = vpop.f32.mrb[0].mxu0
  %v607 = vadd.f32 %v519, %v606
  %v608 = vpop.f32.mrb[0].mxu0
  %609 = vdwg.mxu0
  %v610 = vmul.f32 %v604, 0.5
  %v611 = vmul.f32 %v607, 0.5
  %v612 = vtanh.pop %v610
  %v613 = vtanh.pop %v611
  %v614 = vadd.f32 %v612, 1.0
  %v615 = vadd.f32 %v613, 1.0
  %v616 = vmul.f32 %v614, 0.5
  %v617 = vmul.f32 %v615, 0.5
  %618 = vst [vmem:[%s11] sm:$0xff] %v616
  %619 = vst [vmem:[%s11 + $0x8] sm:$0xff] %v617
  // Predicated region
  $region46: #{mlp_g_forward.1} parent=0 // pred_check
    _
  $region47: #{mlp_g_forward.1} parent=0 // pred_check_branch
    %621 = sbr.rel (0) target = $region49
  $region48: #{mlp_g_forward.1} parent=0 // pred_region
    _
  $region49: #{mlp_g_forward.1} parent=0 // pred_fallthru
    _
  // Predicated region
  $region50: #{mlp_g_forward.1} parent=0 // pred_check
    _
  $region51: #{mlp_g_forward.1} parent=0 // pred_check_branch
    %623 = sbr.rel (0) target = $region53
  $region52: #{mlp_g_forward.1} parent=0 // pred_region
    _
  $region53: #{mlp_g_forward.1} parent=0 // pred_fallthru
    _

</llo_original>
